<compile_context>
chip_gen: v6e
topology: v6e:2x2x1
jax: 0.10.0
libtpu: 0.0.40
codegen_flags: <defaults>
</compile_context>

<pallas_src>
import functools

import jax
import jax.numpy as jnp
from jax.experimental import pallas as pl
from jax.experimental.pallas import tpu as pltpu


def _mask_obs_kernel(log_alpha_ref, noise_ref, obs_ref, fused_ref, w_ref, b_ref,
                     obs_exp_ref, obs_rem_ref, acts_exp_ref, acts_rem_ref,
                     *, temp, epsilon):
    # concrete_transformation; log_alpha is precomputed (1, D), VMEM-resident.
    u = noise_ref[...]                                           # (TB, D)
    log_u = jnp.log((u + epsilon) / (1.0 - u + epsilon))         # == log(u+eps)-log(1-u+eps)
    mask = jax.nn.sigmoid((log_u + log_alpha_ref[...]) * (1.0 / temp))

    obs = obs_ref[...]
    fused = fused_ref[...]
    md = mask * (obs - fused)
    obs_exp = fused + md            # == obs*mask + fused*(1-mask)
    obs_rem = obs - md              # == obs*(1-mask) + fused*mask
    obs_exp_ref[...] = obs_exp
    obs_rem_ref[...] = obs_rem

    # Frozen linear policy head: one MXU matmul over the stacked pair
    # (shares the weight push; output is 128-lane-dense thanks to A padding).
    tb = obs_ref.shape[0]
    x = jnp.concatenate([obs_exp, obs_rem], axis=0)              # (2*TB, D)
    acts = jnp.dot(x, w_ref[...], preferred_element_type=jnp.float32) + b_ref[...]
    acts_exp_ref[...] = acts[:tb]
    acts_rem_ref[...] = acts[tb:]


def mask_obs_forward(obs, fused_obs, logit_p, noise, policy_w, policy_b,
                     temp=0.1, epsilon=1e-8, block_b=None,
                     vmem_limit_bytes=64 * 1024 * 1024):
    """obs, fused_obs, noise: (B, C, H, W) f32; logit_p: (C, H, W);
       policy_w: (C*H*W, A); policy_b: (A,)."""
    B, C, H, W = obs.shape
    D = C * H * W
    A = policy_w.shape[1]
    A_pad = max(128, ((A + 127) // 128) * 128)   # lane-dense acts output width

    # Batch tile size: 5 (TB, D) f32 streams, double-buffered -> keep ~<= 24 MiB.
    if block_b is None:
        budget = 24 * 1024 * 1024
        per_row = 5 * 2 * D * 4
        block_b = max(8, min(512, budget // per_row))
    tb = min(block_b, B)
    if tb < B:
        tb = max(8, (tb // 8) * 8)          # sublane-aligned blocks when tiling
    bp = pl.cdiv(B, tb) * tb                # padded batch
    grid = (bp // tb,)

    f32 = jnp.float32
    obs_f = obs.reshape(B, D).astype(f32)
    fused_f = fused_obs.reshape(B, D).astype(f32)
    noise_f = noise.reshape(B, D).astype(f32)
    if bp != B:
        pad = bp - B
        obs_f = jnp.pad(obs_f, ((0, pad), (0, 0)))
        fused_f = jnp.pad(fused_f, ((0, pad), (0, 0)))
        noise_f = jnp.pad(noise_f, ((0, pad), (0, 0)), constant_values=0.5)

    # p = sigmoid(logit_p); log_alpha hoisted out of the kernel (computed once).
    p = jax.nn.sigmoid(logit_p.reshape(1, D).astype(f32))
    log_alpha = jnp.log(p + epsilon) - jnp.log(1.0 - p + epsilon)

    w_f = jnp.zeros((D, A_pad), f32).at[:, :A].set(policy_w.astype(f32))
    b_f = jnp.zeros((1, A_pad), f32).at[:, :A].set(policy_b.reshape(1, A).astype(f32))

    kernel = functools.partial(_mask_obs_kernel, temp=temp, epsilon=epsilon)

    out_shapes = (
        jax.ShapeDtypeStruct((bp, D), f32),        # obs_exp
        jax.ShapeDtypeStruct((bp, D), f32),        # obs_remain
        jax.ShapeDtypeStruct((bp, A_pad), f32),    # acts_exp (lane-padded)
        jax.ShapeDtypeStruct((bp, A_pad), f32),    # acts_remain (lane-padded)
    )

    tile = lambda shape: pl.BlockSpec(shape, lambda i: (i, 0))       # streamed per batch tile
    resident = lambda shape: pl.BlockSpec(shape, lambda i: (0, 0))   # VMEM-resident across grid

    obs_exp, obs_rem, acts_exp, acts_rem = pl.pallas_call(
        kernel,
        out_shape=out_shapes,
        grid_spec=pltpu.PrefetchScalarGridSpec(
            num_scalar_prefetch=0,
            grid=grid,
            in_specs=[
                resident((1, D)),        # log_alpha
                tile((tb, D)),           # noise
                tile((tb, D)),           # obs
                tile((tb, D)),           # fused_obs
                resident((D, A_pad)),    # policy weight (padded)
                resident((1, A_pad)),    # policy bias (padded)
            ],
            out_specs=[
                tile((tb, D)),
                tile((tb, D)),
                tile((tb, A_pad)),
                tile((tb, A_pad)),
            ],
        ),
        compiler_params=pltpu.CompilerParams(
            dimension_semantics=("parallel",),
            vmem_limit_bytes=vmem_limit_bytes),
    )(log_alpha, noise_f, obs_f, fused_f, w_f, b_f)

    return (obs_exp[:B].reshape(B, C, H, W),
            obs_rem[:B].reshape(B, C, H, W),
            acts_exp[:B, :A],
            acts_rem[:B, :A])


if __name__ == "__main__":
    key = jax.random.PRNGKey(0)
    k_obs, k_fused, k_noise, k_w, k_b = jax.random.split(key, 5)

    B, C, H, W = 2, 4, 16, 16
    D = C * H * W
    A = 8   # action dimension of the synthetic frozen linear policy

    obs = jax.random.normal(k_obs, (B, C, H, W), dtype=jnp.float32)
    fused_obs = jax.random.normal(k_fused, (B, C, H, W), dtype=jnp.float32)

    # initializer == 'one': logit_p = ones(mask_shape); mask_shape == input_shape
    logit_p = jnp.ones((C, H, W), dtype=jnp.float32)

    # uniform noise of concrete_transformation (np.random.uniform in torch code)
    noise = jax.random.uniform(k_noise, (B, C, H, W), dtype=jnp.float32)

    # deterministic synthetic frozen policy parameters
    policy_w = 0.02 * jax.random.normal(k_w, (D, A), dtype=jnp.float32)
    policy_b = 0.1 * jax.random.normal(k_b, (A,), dtype=jnp.float32)

    obs_exp, obs_remain, acts_exp, acts_remain = mask_obs_forward(
        obs, fused_obs, logit_p, noise, policy_w, policy_b,
        temp=0.1, epsilon=1e-8)
    jax.block_until_ready((obs_exp, obs_remain, acts_exp, acts_remain))

    # pure-JAX reference (concrete_transformation + blend + linear policy)
    eps = 1e-8
    p_ref = jax.nn.sigmoid(logit_p)
    log_alpha_ref = jnp.log(p_ref + eps) - jnp.log(1.0 - p_ref + eps)
    # log(u+eps) - log(1-u+eps) == log((u+eps)/(1-u+eps))
    log_u_ref = jnp.log((noise + eps) / (1.0 - noise + eps))
    mask_ref = jax.nn.sigmoid((log_u_ref + log_alpha_ref[None]) / 0.1)
    obs_exp_ref = obs * mask_ref + fused_obs * (1.0 - mask_ref)
    obs_rem_ref = obs * (1.0 - mask_ref) + fused_obs * mask_ref
    acts_exp_ref = obs_exp_ref.reshape(B, D) @ policy_w + policy_b
    acts_rem_ref = obs_rem_ref.reshape(B, D) @ policy_w + policy_b

    assert obs_exp.shape == (B, C, H, W) and acts_exp.shape == (B, A)
    assert jnp.allclose(obs_exp, obs_exp_ref, atol=2e-5)
    assert jnp.allclose(obs_remain, obs_rem_ref, atol=2e-5)
    assert jnp.allclose(acts_exp, acts_exp_ref, atol=2e-4)
    assert jnp.allclose(acts_remain, acts_rem_ref, atol=2e-4)

    print("KERNEL_OK")
</pallas_src>

<mosaic_0001>
module attributes {stable_mosaic.version = 11 : i64} {
  func.func @_mask_obs_kernel(%arg0: i32, %arg1: memref<1x1024xf32, #tpu.memory_space<vmem>>, %arg2: memref<2x1024xf32, #tpu.memory_space<vmem>>, %arg3: memref<2x1024xf32, #tpu.memory_space<vmem>>, %arg4: memref<2x1024xf32, #tpu.memory_space<vmem>>, %arg5: memref<1024x128xf32, #tpu.memory_space<vmem>>, %arg6: memref<1x128xf32, #tpu.memory_space<vmem>>, %arg7: memref<2x1024xf32, #tpu.memory_space<vmem>>, %arg8: memref<2x1024xf32, #tpu.memory_space<vmem>>, %arg9: memref<2x128xf32, #tpu.memory_space<vmem>>, %arg10: memref<2x128xf32, #tpu.memory_space<vmem>>) attributes {dimension_semantics = [#tpu.dimension_semantics<parallel>], iteration_bounds = array<i64: 1>, scalar_prefetch = 0 : i64, scratch_operands = 0 : i64, tpu.core_type = #tpu.core_type<tc>, window_params = [{pipeline_mode = #tpu.pipeline_mode<synchronous>, transform_indices = @transform_0, window_bounds = array<i64: 1, 1024>}, {transform_indices = @transform_1, window_bounds = array<i64: 2, 1024>}, {transform_indices = @transform_2, window_bounds = array<i64: 2, 1024>}, {transform_indices = @transform_3, window_bounds = array<i64: 2, 1024>}, {pipeline_mode = #tpu.pipeline_mode<synchronous>, transform_indices = @transform_4, window_bounds = array<i64: 1024, 128>}, {pipeline_mode = #tpu.pipeline_mode<synchronous>, transform_indices = @transform_5, window_bounds = array<i64: 1, 128>}, {transform_indices = @transform_6, window_bounds = array<i64: 2, 1024>}, {transform_indices = @transform_7, window_bounds = array<i64: 2, 1024>}, {transform_indices = @transform_8, window_bounds = array<i64: 2, 128>}, {transform_indices = @transform_9, window_bounds = array<i64: 2, 128>}]} {
    %c0 = arith.constant 0 : index
    %c0_0 = arith.constant 0 : index
    %0 = vector.load %arg2[%c0, %c0_0] : memref<2x1024xf32, #tpu.memory_space<vmem>>, vector<2x1024xf32>
    %cst = arith.constant 9.99999993E-9 : f32
    %1 = vector.broadcast %cst : f32 to vector<2x1024xf32>
    %2 = arith.addf %0, %1 : vector<2x1024xf32>
    %cst_1 = arith.constant 1.000000e+00 : f32
    %3 = vector.broadcast %cst_1 : f32 to vector<2x1024xf32>
    %4 = arith.subf %3, %0 : vector<2x1024xf32>
    %cst_2 = arith.constant 9.99999993E-9 : f32
    %5 = vector.broadcast %cst_2 : f32 to vector<2x1024xf32>
    %6 = arith.addf %4, %5 : vector<2x1024xf32>
    %7 = arith.divf %2, %6 : vector<2x1024xf32>
    %8 = math.log %7 : vector<2x1024xf32>
    %c0_3 = arith.constant 0 : index
    %c0_4 = arith.constant 0 : index
    %9 = vector.load %arg1[%c0_3, %c0_4] : memref<1x1024xf32, #tpu.memory_space<vmem>>, vector<1x1024xf32>
    %10 = vector.broadcast %9 : vector<1x1024xf32> to vector<2x1024xf32>
    %11 = arith.addf %8, %10 : vector<2x1024xf32>
    %cst_5 = arith.constant 1.000000e+01 : f32
    %12 = vector.broadcast %cst_5 : f32 to vector<2x1024xf32>
    %13 = arith.mulf %11, %12 : vector<2x1024xf32>
    %14 = arith.negf %13 : vector<2x1024xf32>
    %15 = math.exp %14 : vector<2x1024xf32>
    %cst_6 = arith.constant 1.000000e+00 : f32
    %16 = vector.broadcast %cst_6 : f32 to vector<2x1024xf32>
    %17 = arith.addf %16, %15 : vector<2x1024xf32>
    %18 = arith.divf %16, %17 : vector<2x1024xf32>
    %c0_7 = arith.constant 0 : index
    %c0_8 = arith.constant 0 : index
    %19 = vector.load %arg3[%c0_7, %c0_8] : memref<2x1024xf32, #tpu.memory_space<vmem>>, vector<2x1024xf32>
    %c0_9 = arith.constant 0 : index
    %c0_10 = arith.constant 0 : index
    %20 = vector.load %arg4[%c0_9, %c0_10] : memref<2x1024xf32, #tpu.memory_space<vmem>>, vector<2x1024xf32>
    %21 = arith.subf %19, %20 : vector<2x1024xf32>
    %22 = arith.mulf %18, %21 : vector<2x1024xf32>
    %23 = arith.addf %20, %22 : vector<2x1024xf32>
    %24 = arith.subf %19, %22 : vector<2x1024xf32>
    %c0_11 = arith.constant 0 : index
    %c0_12 = arith.constant 0 : index
    %25 = vector.load %arg7[%c0_11, %c0_12] : memref<2x1024xf32, #tpu.memory_space<vmem>>, vector<2x1024xf32>
    tpu.vector_store %arg7[%c0_11, %c0_12], %23 {strides = array<i32>} : memref<2x1024xf32, #tpu.memory_space<vmem>>, vector<2x1024xf32>,
    %c0_13 = arith.constant 0 : index
    %c0_14 = arith.constant 0 : index
    %26 = vector.load %arg8[%c0_13, %c0_14] : memref<2x1024xf32, #tpu.memory_space<vmem>>, vector<2x1024xf32>
    tpu.vector_store %arg8[%c0_13, %c0_14], %24 {strides = array<i32>} : memref<2x1024xf32, #tpu.memory_space<vmem>>, vector<2x1024xf32>,
    %27 = tpu.concatenate %23, %24 in 0 : vector<2x1024xf32>, vector<2x1024xf32> -> vector<4x1024xf32>
    %c0_15 = arith.constant 0 : index
    %c0_16 = arith.constant 0 : index
    %28 = vector.load %arg5[%c0_15, %c0_16] : memref<1024x128xf32, #tpu.memory_space<vmem>>, vector<1024x128xf32>
    %cst_17 = arith.constant dense<0.000000e+00> : vector<4x128xf32>
    %29 = tpu.matmul %27, %28, %cst_17 {dimension_numbers = #tpu.dot_dimension_numbers<[1], [0], [0], [1], [0, 0, 1, 1], [], []>} : vector<4x1024xf32>, vector<1024x128xf32>, vector<4x128xf32> -> vector<4x128xf32>
    %c0_18 = arith.constant 0 : index
    %c0_19 = arith.constant 0 : index
    %30 = vector.load %arg6[%c0_18, %c0_19] : memref<1x128xf32, #tpu.memory_space<vmem>>, vector<1x128xf32>
    %31 = vector.broadcast %30 : vector<1x128xf32> to vector<4x128xf32>
    %32 = arith.addf %29, %31 : vector<4x128xf32>
    %33 = vector.extract_strided_slice %32 {offsets = [0, 0], sizes = [2, 128], strides = [1, 1]} : vector<4x128xf32> to vector<2x128xf32>
    %c0_20 = arith.constant 0 : index
    %c0_21 = arith.constant 0 : index
    %34 = vector.load %arg9[%c0_20, %c0_21] : memref<2x128xf32, #tpu.memory_space<vmem>>, vector<2x128xf32>
    tpu.vector_store %arg9[%c0_20, %c0_21], %33 {strides = array<i32>} : memref<2x128xf32, #tpu.memory_space<vmem>>, vector<2x128xf32>,
    %35 = vector.extract_strided_slice %32 {offsets = [2, 0], sizes = [2, 128], strides = [1, 1]} : vector<4x128xf32> to vector<2x128xf32>
    %c0_22 = arith.constant 0 : index
    %c0_23 = arith.constant 0 : index
    %36 = vector.load %arg10[%c0_22, %c0_23] : memref<2x128xf32, #tpu.memory_space<vmem>>, vector<2x128xf32>
    tpu.vector_store %arg10[%c0_22, %c0_23], %35 {strides = array<i32>} : memref<2x128xf32, #tpu.memory_space<vmem>>, vector<2x128xf32>,
    return
  }
  func.func @transform_0(%arg0: i32) -> (i32, i32) {
    %c0_i32 = arith.constant 0 : i32
    %c0_i32_0 = arith.constant 0 : i32
    %c0_i32_1 = arith.constant 0 : i32
    return %c0_i32, %c0_i32_0 : i32, i32
  }
  func.func @transform_1(%arg0: i32) -> (i32, i32) {
    %c0_i32 = arith.constant 0 : i32
    %c0_i32_0 = arith.constant 0 : i32
    return %arg0, %c0_i32 : i32, i32
  }
  func.func @transform_2(%arg0: i32) -> (i32, i32) {
    %c0_i32 = arith.constant 0 : i32
    %c0_i32_0 = arith.constant 0 : i32
    return %arg0, %c0_i32 : i32, i32
  }
  func.func @transform_3(%arg0: i32) -> (i32, i32) {
    %c0_i32 = arith.constant 0 : i32
    %c0_i32_0 = arith.constant 0 : i32
    return %arg0, %c0_i32 : i32, i32
  }
  func.func @transform_4(%arg0: i32) -> (i32, i32) {
    %c0_i32 = arith.constant 0 : i32
    %c0_i32_0 = arith.constant 0 : i32
    %c0_i32_1 = arith.constant 0 : i32
    return %c0_i32, %c0_i32_0 : i32, i32
  }
  func.func @transform_5(%arg0: i32) -> (i32, i32) {
    %c0_i32 = arith.constant 0 : i32
    %c0_i32_0 = arith.constant 0 : i32
    %c0_i32_1 = arith.constant 0 : i32
    return %c0_i32, %c0_i32_0 : i32, i32
  }
  func.func @transform_6(%arg0: i32) -> (i32, i32) {
    %c0_i32 = arith.constant 0 : i32
    %c0_i32_0 = arith.constant 0 : i32
    return %arg0, %c0_i32 : i32, i32
  }
  func.func @transform_7(%arg0: i32) -> (i32, i32) {
    %c0_i32 = arith.constant 0 : i32
    %c0_i32_0 = arith.constant 0 : i32
    return %arg0, %c0_i32 : i32, i32
  }
  func.func @transform_8(%arg0: i32) -> (i32, i32) {
    %c0_i32 = arith.constant 0 : i32
    %c0_i32_0 = arith.constant 0 : i32
    return %arg0, %c0_i32 : i32, i32
  }
  func.func @transform_9(%arg0: i32) -> (i32, i32) {
    %c0_i32 = arith.constant 0 : i32
    %c0_i32_0 = arith.constant 0 : i32
    return %arg0, %c0_i32 : i32, i32
  }
}

</mosaic_0001>

<llo_original>
// kernel: tpu_custom_call.1
$region0: #{tpu_custom_call.1}
  #allocation0 [shape = 'u32[]', space=smem, size = 0x4, offset = 0x4, fixed_abs, tag = 'smem constant byte address 0x4 - core index']
  #allocation1 [shape = 'u32[144,128]{1,0:T(1,128)}', space=vmem, size = 0x12000, scoped, tag = 'internal scratch']
  %s0 = inlined_call_operand.hbm [shape: f32[1,1024], index: 0, kind: input, shape index: {}]
  %s1 = inlined_call_operand.hbm [shape: f32[2,1024], index: 1, kind: input, shape index: {}]
  %s2 = inlined_call_operand.hbm [shape: f32[2,1024], index: 2, kind: input, shape index: {}]
  %s3 = inlined_call_operand.hbm [shape: f32[2,1024], index: 3, kind: input, shape index: {}]
  %s4 = inlined_call_operand.hbm [shape: f32[1024,128], index: 4, kind: input, shape index: {}]
  %s5 = inlined_call_operand.vmem [shape: f32[1,128], index: 5, kind: input, shape index: {}]
  %s6 = inlined_call_operand.hbm [shape: f32[2,1024], index: 6, kind: output, shape index: {0}]
  %s7 = inlined_call_operand.hbm [shape: f32[2,1024], index: 7, kind: output, shape index: {1}]
  %s8 = inlined_call_operand.hbm [shape: f32[2,128], index: 8, kind: output, shape index: {2}]
  %s9 = inlined_call_operand.hbm [shape: f32[2,128], index: 9, kind: output, shape index: {3}]
  %10 = xla_tuple %s6, %s7, %s8, %s9
  %s11 = sld [smem:[#allocation0]]
  $region78: #{tpu_custom_call.1} parent=0
    _
  %s13 = ssub.s32 1, %s11
  %s14 = scalar_select 0, %s13, %s11
  $region1: #{tpu_custom_call.1} parent=0
    #allocation2 [shape = 'u8[4096]{0}', space=vmem, size = 0x1000, scoped, tag = 'input window, operand 0, single buffered']
    #allocation3 [shape = 's32[1]{0}', space=sflag, size = 0x4, scoped, tag = 'scoped memory for tpu_custom_call.1']
    #allocation4 [shape = 's32[1]{0}', space=sflag, size = 0x4, scoped, tag = 'scoped memory for tpu_custom_call.1']
    #allocation5 [shape = 'u8[8192]{0}', space=vmem, size = 0x2000, scoped, tag = 'input window, operand 1, single buffered']
    #allocation6 [shape = 's32[1]{0}', space=sflag, size = 0x4, scoped, tag = 'scoped memory for tpu_custom_call.1']
    #allocation7 [shape = 'u8[8192]{0}', space=vmem, size = 0x2000, scoped, tag = 'input window, operand 2, single buffered']
    #allocation8 [shape = 'u8[8192]{0}', space=vmem, size = 0x2000, scoped, tag = 'input window, operand 3, single buffered']
    #allocation9 [shape = 's32[1]{0}', space=sflag, size = 0x4, scoped, tag = 'scoped memory for tpu_custom_call.1']
    #allocation10 [shape = 'u8[524288]{0}', space=vmem, size = 0x80000, scoped, tag = 'input window, operand 4, single buffered']
    #allocation11 [shape = 'u8[8192]{0}', space=vmem, size = 0x2000, scoped, tag = 'output window, operand 0, single buffered']
    #allocation12 [shape = 'u8[8192]{0}', space=vmem, size = 0x2000, scoped, tag = 'output window, operand 1, single buffered']
    #allocation13 [shape = 's32[1]{0}', space=sflag, size = 0x4, scoped, tag = 'scoped memory for tpu_custom_call.1']
    #allocation14 [shape = 'u8[1024]{0}', space=vmem, size = 0x400, scoped, tag = 'output window, operand 2, single buffered']
    #allocation15 [shape = 'u8[1024]{0}', space=vmem, size = 0x400, scoped, tag = 'output window, operand 3, single buffered']
    #allocation16 [shape = 's32[1]{0}', space=sflag, size = 0x4, scoped, tag = 'scoped memory for tpu_custom_call.1']
    %15 = vsyncpa [#allocation3], 0
    %16 = vsyncpa [#allocation6], 0
    %17 = vsyncpa [#allocation9], 0
    %18 = vsyncpa [#allocation4], 0
    %19 = vsyncpa [#allocation13], 0
    %20 = vsyncpa [#allocation16], 0
    // Predicated region
    $region2: #{tpu_custom_call.1} parent=1 // pred_check
      _
    $region3: #{tpu_custom_call.1} parent=1 // pred_check_branch
      %22 = sbr.rel (0) target = $region5
    $region4: #{tpu_custom_call.1} parent=1 // pred_region
      %s24 = ssub.s32 128, 128
      %25 = vsyncadd [#allocation3], %s24
      %s27 = sshll.u32 [#allocation2], 4
      %s28 = int_to_ptr.vmem [resolvable:$true] %s27
      %30 = dma.hbm_to_vmem [thread:$0]  %s0, 128, %s28, [#allocation3]
    $region5: #{tpu_custom_call.1} parent=1 // pred_fallthru
      _
    // Predicated region
    $region6: #{tpu_custom_call.1} parent=1 // pred_check
      _
    $region7: #{tpu_custom_call.1} parent=1 // pred_check_branch
      %32 = sbr.rel (0) target = $region9
    $region8: #{tpu_custom_call.1} parent=1 // pred_region
      %s34 = ssub.s32 256, 256
      %35 = vsyncadd [#allocation6], %s34
      %s37 = sshll.u32 [#allocation5], 4
      %s38 = int_to_ptr.vmem [resolvable:$true] %s37
      %40 = dma.hbm_to_vmem [thread:$0]  %s1, 256, %s38, [#allocation6]
    $region9: #{tpu_custom_call.1} parent=1 // pred_fallthru
      _
    // Predicated region
    $region10: #{tpu_custom_call.1} parent=1 // pred_check
      _
    $region11: #{tpu_custom_call.1} parent=1 // pred_check_branch
      %42 = sbr.rel (0) target = $region13
    $region12: #{tpu_custom_call.1} parent=1 // pred_region
      %s44 = ssub.s32 256, 256
      %45 = vsyncadd [#allocation6], %s44
      %s47 = sshll.u32 [#allocation7], 4
      %s48 = int_to_ptr.vmem [resolvable:$true] %s47
      %50 = dma.hbm_to_vmem [thread:$0]  %s2, 256, %s48, [#allocation6]
    $region13: #{tpu_custom_call.1} parent=1 // pred_fallthru
      _
    // Predicated region
    $region14: #{tpu_custom_call.1} parent=1 // pred_check
      _
    $region15: #{tpu_custom_call.1} parent=1 // pred_check_branch
      %52 = sbr.rel (0) target = $region17
    $region16: #{tpu_custom_call.1} parent=1 // pred_region
      %s54 = ssub.s32 256, 256
      %55 = vsyncadd [#allocation9], %s54
      %s57 = sshll.u32 [#allocation8], 4
      %s58 = int_to_ptr.vmem [resolvable:$true] %s57
      %60 = dma.hbm_to_vmem [thread:$0]  %s3, 256, %s58, [#allocation9]
    $region17: #{tpu_custom_call.1} parent=1 // pred_fallthru
      _
    // Predicated region
    $region18: #{tpu_custom_call.1} parent=1 // pred_check
      _
    $region19: #{tpu_custom_call.1} parent=1 // pred_check_branch
      %62 = sbr.rel (0) target = $region21
    $region20: #{tpu_custom_call.1} parent=1 // pred_region
      %s64 = ssub.s32 16384, 16384
      %65 = vsyncadd [#allocation9], %s64
      %s66 = sshll.u32 [#allocation10], 4
      %s67 = int_to_ptr.vmem [resolvable:$true] %s66
      %72 = dma.hbm_to_vmem [thread:$0]  %s4, 16384, %s67, [#allocation9], 128, 128, 8
    $region21: #{tpu_custom_call.1} parent=1 // pred_fallthru
      _
    // Predicated region
    $region22: #{tpu_custom_call.1} parent=1 // pred_check
      _
    $region23: #{tpu_custom_call.1} parent=1 // pred_check_branch
      %74 = sbr.rel (0) target = $region25
    $region24: #{tpu_custom_call.1} parent=1 // pred_region
      _
    $region25: #{tpu_custom_call.1} parent=1 // pred_fallthru
      _
    // Predicated region
    $region26: #{tpu_custom_call.1} parent=1 // pred_check
      _
    $region27: #{tpu_custom_call.1} parent=1 // pred_check_branch
      %76 = sbr.rel (0) target = $region29
    $region28: #{tpu_custom_call.1} parent=1 // pred_region
      %77 = dma.done [#allocation3], 128
    $region29: #{tpu_custom_call.1} parent=1 // pred_fallthru
      _
    // Predicated region
    $region30: #{tpu_custom_call.1} parent=1 // pred_check
      _
    $region31: #{tpu_custom_call.1} parent=1 // pred_check_branch
      %79 = sbr.rel (0) target = $region33
    $region32: #{tpu_custom_call.1} parent=1 // pred_region
      %80 = dma.done [#allocation6], 256
    $region33: #{tpu_custom_call.1} parent=1 // pred_fallthru
      _
    // Predicated region
    $region34: #{tpu_custom_call.1} parent=1 // pred_check
      _
    $region35: #{tpu_custom_call.1} parent=1 // pred_check_branch
      %82 = sbr.rel (0) target = $region37
    $region36: #{tpu_custom_call.1} parent=1 // pred_region
      %83 = dma.done [#allocation6], 256
    $region37: #{tpu_custom_call.1} parent=1 // pred_fallthru
      _
    // Predicated region
    $region38: #{tpu_custom_call.1} parent=1 // pred_check
      _
    $region39: #{tpu_custom_call.1} parent=1 // pred_check_branch
      %85 = sbr.rel (0) target = $region41
    $region40: #{tpu_custom_call.1} parent=1 // pred_region
      %86 = dma.done [#allocation9], 256
    $region41: #{tpu_custom_call.1} parent=1 // pred_fallthru
      _
    // Predicated region
    $region42: #{tpu_custom_call.1} parent=1 // pred_check
      _
    $region43: #{tpu_custom_call.1} parent=1 // pred_check_branch
      %88 = sbr.rel (0) target = $region45
    $region44: #{tpu_custom_call.1} parent=1 // pred_region
      %89 = dma.done [#allocation9], 16384
    $region45: #{tpu_custom_call.1} parent=1 // pred_fallthru
      _
    %v90 = vld [vmem:[#allocation5] sm:$0xff]
    %v91 = vld [vmem:[#allocation5 + $0x8] sm:$0xff]
    %v92 = vadd.f32 %v90, 1e-08
    %v93 = vadd.f32 %v91, 1e-08
    %v94 = vsub.f32 1.0, %v90
    %v95 = vsub.f32 1.0, %v91
    %v96 = vadd.f32 %v94, 1e-08
    %v97 = vadd.f32 %v95, 1e-08
    %v98 = vrcp.pop %v96
    %v99 = vmul.f32 %v92, %v98
    %v100 = vrcp.pop %v97
    %v101 = vmul.f32 %v93, %v100
    %v102 = vlog2.pop %v99
    %v103 = vmul.f32 %v102, 0.6931472
    %v104 = vlog2.pop %v101
    %v105 = vmul.f32 %v104, 0.6931472
    %v106 = vld [vmem:[#allocation2] sm:$0xff]
    %v108 = vlaneseq
    %v109 = vshrl.u32 %v108, 7
    %v110 = vsub.s32 0, %v109
    %v111 = vrot.slane %v106, %v110
    %v112 = vlaneseq
    %v113 = vshrl.u32 %v112, 7
    %v114 = vsub.s32 1, %v113
    %v115 = vrot.slane %v106, %v114
    %v116 = vlaneseq
    %v117 = vshrl.u32 %v116, 7
    %v118 = vsub.s32 2, %v117
    %v119 = vrot.slane %v106, %v118
    %v120 = vlaneseq
    %v121 = vshrl.u32 %v120, 7
    %v122 = vsub.s32 3, %v121
    %v123 = vrot.slane %v106, %v122
    %v124 = vlaneseq
    %v125 = vshrl.u32 %v124, 7
    %v126 = vsub.s32 4, %v125
    %v127 = vrot.slane %v106, %v126
    %v128 = vlaneseq
    %v129 = vshrl.u32 %v128, 7
    %v130 = vsub.s32 5, %v129
    %v131 = vrot.slane %v106, %v130
    %v132 = vlaneseq
    %v133 = vshrl.u32 %v132, 7
    %v134 = vsub.s32 6, %v133
    %v135 = vrot.slane %v106, %v134
    %v136 = vlaneseq
    %v137 = vshrl.u32 %v136, 7
    %v138 = vsub.s32 7, %v137
    %v139 = vrot.slane %v106, %v138
    %v140 = vcombine.low %v111, %v115
    %v141 = vcombine.low %v119, %v123
    %v143 = vunpack.c.l.s4 1983009808
    %v144 = vunpack.c.0.s8 %v143
    %v145 = vlaneseq
    %v146 = vshrl.u32 %v145, 7
    %v147 = vsub.s32 %v144, %v146
    %v148 = vrot.slane %v140, %v147
    %v150 = vunpack.c.l.s4 1983009808
    %v151 = vunpack.c.0.s8 %v150
    %v152 = vlaneseq
    %v153 = vshrl.u32 %v152, 7
    %v154 = vsub.s32 %v151, %v153
    %v155 = vrot.slane %v141, %v154
    %v156 = vcombine.low %v148, %v155
    %v157 = vcombine.low %v127, %v131
    %v158 = vcombine.low %v135, %v139
    %v160 = vunpack.c.l.s4 1983009808
    %v161 = vunpack.c.0.s8 %v160
    %v162 = vlaneseq
    %v163 = vshrl.u32 %v162, 7
    %v164 = vsub.s32 %v161, %v163
    %v165 = vrot.slane %v157, %v164
    %v167 = vunpack.c.l.s4 1983009808
    %v168 = vunpack.c.0.s8 %v167
    %v169 = vlaneseq
    %v170 = vshrl.u32 %v169, 7
    %v171 = vsub.s32 %v168, %v170
    %v172 = vrot.slane %v158, %v171
    %v173 = vcombine.low %v165, %v172
    %v176 = vadd.f32 %v103, %v156
    %v177 = vadd.f32 %v105, %v173
    %v178 = vmul.f32 %v176, 10.0
    %v179 = vmul.f32 %v177, 10.0
    %v180 = vxor.u32 %v178, 2147483648
    %v181 = vxor.u32 %v179, 2147483648
    %v182 = vmul.f32 %v180, 1.442695
    %v183 = vpow.pop %v182
    %v184 = vmul.f32 %v181, 1.442695
    %v185 = vpow.pop %v184
    %v186 = vadd.f32 %v183, 1.0
    %v187 = vadd.f32 %v185, 1.0
    %v188 = vrcp.pop %v186
    %v189 = vmul.f32 1.0, %v188
    %v190 = vrcp.pop %v187
    %v191 = vmul.f32 1.0, %v190
    %v192 = vld [vmem:[#allocation7] sm:$0xff]
    %v193 = vld [vmem:[#allocation7 + $0x8] sm:$0xff]
    %v194 = vld [vmem:[#allocation8] sm:$0xff]
    %v195 = vld [vmem:[#allocation8 + $0x8] sm:$0xff]
    %v196 = vsub.f32 %v192, %v194
    %v197 = vsub.f32 %v193, %v195
    %v198 = vmul.f32 %v189, %v196
    %v199 = vmul.f32 %v191, %v197
    %v200 = vadd.f32 %v194, %v198
    %v201 = vadd.f32 %v195, %v199
    %v202 = vsub.f32 %v192, %v198
    %v203 = vsub.f32 %v193, %v199
    %204 = vst [vmem:[#allocation11] sm:$0xff] %v200
    %205 = vst [vmem:[#allocation11 + $0x8] sm:$0xff] %v201
    %206 = vst [vmem:[#allocation12] sm:$0xff] %v202
    %207 = vst [vmem:[#allocation12 + $0x8] sm:$0xff] %v203
    %v210 = vcombine.high %v200, %v200
    %v212 = vunpack.c.l.s4 1983009808
    %v213 = vunpack.c.0.s8 %v212
    %v214 = vlaneseq
    %v215 = vshrl.u32 %v214, 7
    %v216 = vsub.s32 %v213, %v215
    %v217 = vrot.slane %v200, %v216
    %v219 = vunpack.c.l.s4 1983009808
    %v220 = vunpack.c.0.s8 %v219
    %v221 = vlaneseq
    %v222 = vshrl.u32 %v221, 7
    %v223 = vsub.s32 %v220, %v222
    %v224 = vrot.slane %v210, %v223
    %v225 = vcombine.high %v217, %v217
    %v226 = vcombine.high %v224, %v224
    %v227 = vcombine.high %v201, %v201
    %v229 = vunpack.c.l.s4 1983009808
    %v230 = vunpack.c.0.s8 %v229
    %v231 = vlaneseq
    %v232 = vshrl.u32 %v231, 7
    %v233 = vsub.s32 %v230, %v232
    %v234 = vrot.slane %v201, %v233
    %v236 = vunpack.c.l.s4 1983009808
    %v237 = vunpack.c.0.s8 %v236
    %v238 = vlaneseq
    %v239 = vshrl.u32 %v238, 7
    %v240 = vsub.s32 %v237, %v239
    %v241 = vrot.slane %v227, %v240
    %v242 = vcombine.high %v234, %v234
    %v243 = vcombine.high %v241, %v241
    %v254 = vcombine.low %v202, %v202
    %v256 = vunpack.c.l.s4 1983009808
    %v257 = vunpack.c.0.s8 %v256
    %v258 = vlaneseq
    %v259 = vshrl.u32 %v258, 7
    %v260 = vsub.s32 %v257, %v259
    %v261 = vrot.slane %v254, %v260
    %v263 = vunpack.c.l.s4 1983009808
    %v264 = vunpack.c.0.s8 %v263
    %v265 = vlaneseq
    %v266 = vshrl.u32 %v265, 7
    %v267 = vsub.s32 %v264, %v266
    %v268 = vrot.slane %v202, %v267
    %v269 = vcombine.high %v261, %v261
    %v270 = vcombine.high %v268, %v268
    %v271 = vcombine.low %v203, %v203
    %v273 = vunpack.c.l.s4 1983009808
    %v274 = vunpack.c.0.s8 %v273
    %v275 = vlaneseq
    %v276 = vshrl.u32 %v275, 7
    %v277 = vsub.s32 %v274, %v276
    %v278 = vrot.slane %v271, %v277
    %v280 = vunpack.c.l.s4 1983009808
    %v281 = vunpack.c.0.s8 %v280
    %v282 = vlaneseq
    %v283 = vshrl.u32 %v282, 7
    %v284 = vsub.s32 %v281, %v283
    %v285 = vrot.slane %v203, %v284
    %v286 = vcombine.high %v278, %v278
    %v287 = vcombine.high %v285, %v285
    %vm296 = vcmask 1041408
    %v297 = vsel %vm296, %v217, %v261
    %v298 = vsel %vm296, %v225, %v269
    %v299 = vsel %vm296, %v224, %v268
    %v300 = vsel %vm296, %v226, %v270
    %v301 = vsel %vm296, %v234, %v278
    %v302 = vsel %vm296, %v242, %v286
    %v303 = vsel %vm296, %v241, %v285
    %v304 = vsel %vm296, %v243, %v287
    %v305 = vld [vmem:[#allocation10] sm:$0xff]
    %v306 = vld [vmem:[#allocation10 + $0x8] sm:$0xff]
    %v307 = vld [vmem:[#allocation10 + $0x10] sm:$0xff]
    %v308 = vld [vmem:[#allocation10 + $0x18] sm:$0xff]
    %v309 = vld [vmem:[#allocation10 + $0x20] sm:$0xff]
    %v310 = vld [vmem:[#allocation10 + $0x28] sm:$0xff]
    %v311 = vld [vmem:[#allocation10 + $0x30] sm:$0xff]
    %v312 = vld [vmem:[#allocation10 + $0x38] sm:$0xff]
    %v313 = vld [vmem:[#allocation10 + $0x40] sm:$0xff]
    %v314 = vld [vmem:[#allocation10 + $0x48] sm:$0xff]
    %v315 = vld [vmem:[#allocation10 + $0x50] sm:$0xff]
    %v316 = vld [vmem:[#allocation10 + $0x58] sm:$0xff]
    %v317 = vld [vmem:[#allocation10 + $0x60] sm:$0xff]
    %v318 = vld [vmem:[#allocation10 + $0x68] sm:$0xff]
    %v319 = vld [vmem:[#allocation10 + $0x70] sm:$0xff]
    %v320 = vld [vmem:[#allocation10 + $0x78] sm:$0xff]
    %v321 = vld [vmem:[#allocation10 + $0x80] sm:$0xff]
    %v322 = vld [vmem:[#allocation10 + $0x88] sm:$0xff]
    %v323 = vld [vmem:[#allocation10 + $0x90] sm:$0xff]
    %v324 = vld [vmem:[#allocation10 + $0x98] sm:$0xff]
    %v325 = vld [vmem:[#allocation10 + $0xa0] sm:$0xff]
    %v326 = vld [vmem:[#allocation10 + $0xa8] sm:$0xff]
    %v327 = vld [vmem:[#allocation10 + $0xb0] sm:$0xff]
    %v328 = vld [vmem:[#allocation10 + $0xb8] sm:$0xff]
    %v329 = vld [vmem:[#allocation10 + $0xc0] sm:$0xff]
    %v330 = vld [vmem:[#allocation10 + $0xc8] sm:$0xff]
    %v331 = vld [vmem:[#allocation10 + $0xd0] sm:$0xff]
    %v332 = vld [vmem:[#allocation10 + $0xd8] sm:$0xff]
    %v333 = vld [vmem:[#allocation10 + $0xe0] sm:$0xff]
    %v334 = vld [vmem:[#allocation10 + $0xe8] sm:$0xff]
    %v335 = vld [vmem:[#allocation10 + $0xf0] sm:$0xff]
    %v336 = vld [vmem:[#allocation10 + $0xf8] sm:$0xff]
    %v337 = vld [vmem:[#allocation10 + $0x100] sm:$0xff]
    %v338 = vld [vmem:[#allocation10 + $0x108] sm:$0xff]
    %v339 = vld [vmem:[#allocation10 + $0x110] sm:$0xff]
    %v340 = vld [vmem:[#allocation10 + $0x118] sm:$0xff]
    %v341 = vld [vmem:[#allocation10 + $0x120] sm:$0xff]
    %v342 = vld [vmem:[#allocation10 + $0x128] sm:$0xff]
    %v343 = vld [vmem:[#allocation10 + $0x130] sm:$0xff]
    %v344 = vld [vmem:[#allocation10 + $0x138] sm:$0xff]
    %v345 = vld [vmem:[#allocation10 + $0x140] sm:$0xff]
    %v346 = vld [vmem:[#allocation10 + $0x148] sm:$0xff]
    %v347 = vld [vmem:[#allocation10 + $0x150] sm:$0xff]
    %v348 = vld [vmem:[#allocation10 + $0x158] sm:$0xff]
    %v349 = vld [vmem:[#allocation10 + $0x160] sm:$0xff]
    %v350 = vld [vmem:[#allocation10 + $0x168] sm:$0xff]
    %v351 = vld [vmem:[#allocation10 + $0x170] sm:$0xff]
    %v352 = vld [vmem:[#allocation10 + $0x178] sm:$0xff]
    %v353 = vld [vmem:[#allocation10 + $0x180] sm:$0xff]
    %v354 = vld [vmem:[#allocation10 + $0x188] sm:$0xff]
    %v355 = vld [vmem:[#allocation10 + $0x190] sm:$0xff]
    %v356 = vld [vmem:[#allocation10 + $0x198] sm:$0xff]
    %v357 = vld [vmem:[#allocation10 + $0x1a0] sm:$0xff]
    %v358 = vld [vmem:[#allocation10 + $0x1a8] sm:$0xff]
    %v359 = vld [vmem:[#allocation10 + $0x1b0] sm:$0xff]
    %v360 = vld [vmem:[#allocation10 + $0x1b8] sm:$0xff]
    %v361 = vld [vmem:[#allocation10 + $0x1c0] sm:$0xff]
    %v362 = vld [vmem:[#allocation10 + $0x1c8] sm:$0xff]
    %v363 = vld [vmem:[#allocation10 + $0x1d0] sm:$0xff]
    %v364 = vld [vmem:[#allocation10 + $0x1d8] sm:$0xff]
    %v365 = vld [vmem:[#allocation10 + $0x1e0] sm:$0xff]
    %v366 = vld [vmem:[#allocation10 + $0x1e8] sm:$0xff]
    %v367 = vld [vmem:[#allocation10 + $0x1f0] sm:$0xff]
    %v368 = vld [vmem:[#allocation10 + $0x1f8] sm:$0xff]
    %v369 = vld [vmem:[#allocation10 + $0x200] sm:$0xff]
    %v370 = vld [vmem:[#allocation10 + $0x208] sm:$0xff]
    %v371 = vld [vmem:[#allocation10 + $0x210] sm:$0xff]
    %v372 = vld [vmem:[#allocation10 + $0x218] sm:$0xff]
    %v373 = vld [vmem:[#allocation10 + $0x220] sm:$0xff]
    %v374 = vld [vmem:[#allocation10 + $0x228] sm:$0xff]
    %v375 = vld [vmem:[#allocation10 + $0x230] sm:$0xff]
    %v376 = vld [vmem:[#allocation10 + $0x238] sm:$0xff]
    %v377 = vld [vmem:[#allocation10 + $0x240] sm:$0xff]
    %v378 = vld [vmem:[#allocation10 + $0x248] sm:$0xff]
    %v379 = vld [vmem:[#allocation10 + $0x250] sm:$0xff]
    %v380 = vld [vmem:[#allocation10 + $0x258] sm:$0xff]
    %v381 = vld [vmem:[#allocation10 + $0x260] sm:$0xff]
    %v382 = vld [vmem:[#allocation10 + $0x268] sm:$0xff]
    %v383 = vld [vmem:[#allocation10 + $0x270] sm:$0xff]
    %v384 = vld [vmem:[#allocation10 + $0x278] sm:$0xff]
    %v385 = vld [vmem:[#allocation10 + $0x280] sm:$0xff]
    %v386 = vld [vmem:[#allocation10 + $0x288] sm:$0xff]
    %v387 = vld [vmem:[#allocation10 + $0x290] sm:$0xff]
    %v388 = vld [vmem:[#allocation10 + $0x298] sm:$0xff]
    %v389 = vld [vmem:[#allocation10 + $0x2a0] sm:$0xff]
    %v390 = vld [vmem:[#allocation10 + $0x2a8] sm:$0xff]
    %v391 = vld [vmem:[#allocation10 + $0x2b0] sm:$0xff]
    %v392 = vld [vmem:[#allocation10 + $0x2b8] sm:$0xff]
    %v393 = vld [vmem:[#allocation10 + $0x2c0] sm:$0xff]
    %v394 = vld [vmem:[#allocation10 + $0x2c8] sm:$0xff]
    %v395 = vld [vmem:[#allocation10 + $0x2d0] sm:$0xff]
    %v396 = vld [vmem:[#allocation10 + $0x2d8] sm:$0xff]
    %v397 = vld [vmem:[#allocation10 + $0x2e0] sm:$0xff]
    %v398 = vld [vmem:[#allocation10 + $0x2e8] sm:$0xff]
    %v399 = vld [vmem:[#allocation10 + $0x2f0] sm:$0xff]
    %v400 = vld [vmem:[#allocation10 + $0x2f8] sm:$0xff]
    %v401 = vld [vmem:[#allocation10 + $0x300] sm:$0xff]
    %v402 = vld [vmem:[#allocation10 + $0x308] sm:$0xff]
    %v403 = vld [vmem:[#allocation10 + $0x310] sm:$0xff]
    %v404 = vld [vmem:[#allocation10 + $0x318] sm:$0xff]
    %v405 = vld [vmem:[#allocation10 + $0x320] sm:$0xff]
    %v406 = vld [vmem:[#allocation10 + $0x328] sm:$0xff]
    %v407 = vld [vmem:[#allocation10 + $0x330] sm:$0xff]
    %v408 = vld [vmem:[#allocation10 + $0x338] sm:$0xff]
    %v409 = vld [vmem:[#allocation10 + $0x340] sm:$0xff]
    %v410 = vld [vmem:[#allocation10 + $0x348] sm:$0xff]
    %v411 = vld [vmem:[#allocation10 + $0x350] sm:$0xff]
    %v412 = vld [vmem:[#allocation10 + $0x358] sm:$0xff]
    %v413 = vld [vmem:[#allocation10 + $0x360] sm:$0xff]
    %v414 = vld [vmem:[#allocation10 + $0x368] sm:$0xff]
    %v415 = vld [vmem:[#allocation10 + $0x370] sm:$0xff]
    %v416 = vld [vmem:[#allocation10 + $0x378] sm:$0xff]
    %v417 = vld [vmem:[#allocation10 + $0x380] sm:$0xff]
    %v418 = vld [vmem:[#allocation10 + $0x388] sm:$0xff]
    %v419 = vld [vmem:[#allocation10 + $0x390] sm:$0xff]
    %v420 = vld [vmem:[#allocation10 + $0x398] sm:$0xff]
    %v421 = vld [vmem:[#allocation10 + $0x3a0] sm:$0xff]
    %v422 = vld [vmem:[#allocation10 + $0x3a8] sm:$0xff]
    %v423 = vld [vmem:[#allocation10 + $0x3b0] sm:$0xff]
    %v424 = vld [vmem:[#allocation10 + $0x3b8] sm:$0xff]
    %v425 = vld [vmem:[#allocation10 + $0x3c0] sm:$0xff]
    %v426 = vld [vmem:[#allocation10 + $0x3c8] sm:$0xff]
    %v427 = vld [vmem:[#allocation10 + $0x3d0] sm:$0xff]
    %v428 = vld [vmem:[#allocation10 + $0x3d8] sm:$0xff]
    %v429 = vld [vmem:[#allocation10 + $0x3e0] sm:$0xff]
    %v430 = vld [vmem:[#allocation10 + $0x3e8] sm:$0xff]
    %v431 = vld [vmem:[#allocation10 + $0x3f0] sm:$0xff]
    %v432 = vld [vmem:[#allocation10 + $0x3f8] sm:$0xff]
    %v433 = vld [vmem:[%s5] sm:$0x1]
    %v435 = vlaneseq
    %v436 = vshrl.u32 %v435, 7
    %v437 = vsub.s32 0, %v436
    %v438 = vrot.slane %v433, %v437
    %440 = vmatprep.subr.mxu0 0.0
    %441 = vmatpush1.msra.mxu0 %v320
    %442 = vmatprep.subr.mxu0 0.0
    %443 = vmatpush1.msra.mxu0 %v319
    %444 = vmatprep.subr.mxu0 0.0
    %445 = vmatpush1.msra.mxu0 %v318
    %446 = vmatprep.subr.mxu0 0.0
    %447 = vmatpush1.msra.mxu0 %v317
    %448 = vmatprep.subr.mxu0 0.0
    %449 = vmatpush1.msra.mxu0 %v316
    %450 = vmatprep.subr.mxu0 0.0
    %451 = vmatpush1.msra.mxu0 %v315
    %452 = vmatprep.subr.mxu0 0.0
    %453 = vmatpush1.msra.mxu0 %v314
    %454 = vmatprep.subr.mxu0 0.0
    %455 = vmatpush1.msra.mxu0 %v313
    %456 = vmatprep.subr.mxu0 0.0
    %457 = vmatpush1.msra.mxu0 %v312
    %458 = vmatprep.subr.mxu0 0.0
    %459 = vmatpush1.msra.mxu0 %v311
    %460 = vmatprep.subr.mxu0 0.0
    %461 = vmatpush1.msra.mxu0 %v310
    %462 = vmatprep.subr.mxu0 0.0
    %463 = vmatpush1.msra.mxu0 %v309
    %464 = vmatprep.subr.mxu0 0.0
    %465 = vmatpush1.msra.mxu0 %v308
    %466 = vmatprep.subr.mxu0 0.0
    %467 = vmatpush1.msra.mxu0 %v307
    %468 = vmatprep.subr.mxu0 0.0
    %469 = vmatpush1.msra.mxu0 %v306
    %470 = vmatprep.subr.mxu0 0.0
    %471 = vmatpush1.msra.mxu0 %v305
    %472 = vmatprep.subr.mxu0 0.0
    %473 = vmatpush2.msra.mxu0 %v336
    %474 = vmatprep.subr.mxu0 0.0
    %475 = vmatpush2.msra.mxu0 %v335
    %476 = vmatprep.subr.mxu0 0.0
    %477 = vmatpush2.msra.mxu0 %v334
    %478 = vmatprep.subr.mxu0 0.0
    %479 = vmatpush2.msra.mxu0 %v333
    %480 = vmatprep.subr.mxu0 0.0
    %481 = vmatpush2.msra.mxu0 %v332
    %482 = vmatprep.subr.mxu0 0.0
    %483 = vmatpush2.msra.mxu0 %v331
    %484 = vmatprep.subr.mxu0 0.0
    %485 = vmatpush2.msra.mxu0 %v330
    %486 = vmatprep.subr.mxu0 0.0
    %487 = vmatpush2.msra.mxu0 %v329
    %488 = vmatprep.subr.mxu0 0.0
    %489 = vmatpush2.msra.mxu0 %v328
    %490 = vmatprep.subr.mxu0 0.0
    %491 = vmatpush2.msra.mxu0 %v327
    %492 = vmatprep.subr.mxu0 0.0
    %493 = vmatpush2.msra.mxu0 %v326
    %494 = vmatprep.subr.mxu0 0.0
    %495 = vmatpush2.msra.mxu0 %v325
    %496 = vmatprep.subr.mxu0 0.0
    %497 = vmatpush2.msra.mxu0 %v324
    %498 = vmatprep.subr.mxu0 0.0
    %499 = vmatpush2.msra.mxu0 %v323
    %500 = vmatprep.subr.mxu0 0.0
    %501 = vmatpush2.msra.mxu0 %v322
    %502 = vmatprep.subr.mxu0 0.0
    %503 = vmatpush2.msra.mxu0 %v321
    %504 = vmatprep.mubr.f32.mxu0 %v298
    %505 = vmatmul.mubr.f32.gmra.mxu0 %v297
    %v506 = vpop.f32.mrf.mxu0
    %v507 = vadd.f32 %v438, %v506
    %v508 = vpop.f32.mrf.mxu0
    %509 = vdwg.mxu0
    %510 = vmatprep.subr.mxu0 0.0
    %511 = vmatpush1.msra.mxu0 %v352
    %512 = vmatprep.subr.mxu0 0.0
    %513 = vmatpush1.msra.mxu0 %v351
    %514 = vmatprep.subr.mxu0 0.0
    %515 = vmatpush1.msra.mxu0 %v350
    %516 = vmatprep.subr.mxu0 0.0
    %517 = vmatpush1.msra.mxu0 %v349
    %518 = vmatprep.subr.mxu0 0.0
    %519 = vmatpush1.msra.mxu0 %v348
    %520 = vmatprep.subr.mxu0 0.0
    %521 = vmatpush1.msra.mxu0 %v347
    %522 = vmatprep.subr.mxu0 0.0
    %523 = vmatpush1.msra.mxu0 %v346
    %524 = vmatprep.subr.mxu0 0.0
    %525 = vmatpush1.msra.mxu0 %v345
    %526 = vmatprep.subr.mxu0 0.0
    %527 = vmatpush1.msra.mxu0 %v344
    %528 = vmatprep.subr.mxu0 0.0
    %529 = vmatpush1.msra.mxu0 %v343
    %530 = vmatprep.subr.mxu0 0.0
    %531 = vmatpush1.msra.mxu0 %v342
    %532 = vmatprep.subr.mxu0 0.0
    %533 = vmatpush1.msra.mxu0 %v341
    %534 = vmatprep.subr.mxu0 0.0
    %535 = vmatpush1.msra.mxu0 %v340
    %536 = vmatprep.subr.mxu0 0.0
    %537 = vmatpush1.msra.mxu0 %v339
    %538 = vmatprep.subr.mxu0 0.0
    %539 = vmatpush1.msra.mxu0 %v338
    %540 = vmatprep.subr.mxu0 0.0
    %541 = vmatpush1.msra.mxu0 %v337
    %542 = vmatprep.subr.mxu0 0.0
    %543 = vmatpush2.msra.mxu0 %v368
    %544 = vmatprep.subr.mxu0 0.0
    %545 = vmatpush2.msra.mxu0 %v367
    %546 = vmatprep.subr.mxu0 0.0
    %547 = vmatpush2.msra.mxu0 %v366
    %548 = vmatprep.subr.mxu0 0.0
    %549 = vmatpush2.msra.mxu0 %v365
    %550 = vmatprep.subr.mxu0 0.0
    %551 = vmatpush2.msra.mxu0 %v364
    %552 = vmatprep.subr.mxu0 0.0
    %553 = vmatpush2.msra.mxu0 %v363
    %554 = vmatprep.subr.mxu0 0.0
    %555 = vmatpush2.msra.mxu0 %v362
    %556 = vmatprep.subr.mxu0 0.0
    %557 = vmatpush2.msra.mxu0 %v361
    %558 = vmatprep.subr.mxu0 0.0
    %559 = vmatpush2.msra.mxu0 %v360
    %560 = vmatprep.subr.mxu0 0.0
    %561 = vmatpush2.msra.mxu0 %v359
    %562 = vmatprep.subr.mxu0 0.0
    %563 = vmatpush2.msra.mxu0 %v358
    %564 = vmatprep.subr.mxu0 0.0
    %565 = vmatpush2.msra.mxu0 %v357
    %566 = vmatprep.subr.mxu0 0.0
    %567 = vmatpush2.msra.mxu0 %v356
    %568 = vmatprep.subr.mxu0 0.0
    %569 = vmatpush2.msra.mxu0 %v355
    %570 = vmatprep.subr.mxu0 0.0
    %571 = vmatpush2.msra.mxu0 %v354
    %572 = vmatprep.subr.mxu0 0.0
    %573 = vmatpush2.msra.mxu0 %v353
    %574 = vmatprep.mubr.f32.mxu0 %v300
    %575 = vmatmul.mubr.f32.gmra.mxu0 %v299
    %v576 = vpop.f32.mrf.mxu0
    %v577 = vadd.f32 %v507, %v576
    %v578 = vpop.f32.mrf.mxu0
    %579 = vdwg.mxu0
    %580 = vmatprep.subr.mxu0 0.0
    %581 = vmatpush1.msra.mxu0 %v384
    %582 = vmatprep.subr.mxu0 0.0
    %583 = vmatpush1.msra.mxu0 %v383
    %584 = vmatprep.subr.mxu0 0.0
    %585 = vmatpush1.msra.mxu0 %v382
    %586 = vmatprep.subr.mxu0 0.0
    %587 = vmatpush1.msra.mxu0 %v381
    %588 = vmatprep.subr.mxu0 0.0
    %589 = vmatpush1.msra.mxu0 %v380
    %590 = vmatprep.subr.mxu0 0.0
    %591 = vmatpush1.msra.mxu0 %v379
    %592 = vmatprep.subr.mxu0 0.0
    %593 = vmatpush1.msra.mxu0 %v378
    %594 = vmatprep.subr.mxu0 0.0
    %595 = vmatpush1.msra.mxu0 %v377
    %596 = vmatprep.subr.mxu0 0.0
    %597 = vmatpush1.msra.mxu0 %v376
    %598 = vmatprep.subr.mxu0 0.0
    %599 = vmatpush1.msra.mxu0 %v375
    %600 = vmatprep.subr.mxu0 0.0
    %601 = vmatpush1.msra.mxu0 %v374
    %602 = vmatprep.subr.mxu0 0.0
    %603 = vmatpush1.msra.mxu0 %v373
    %604 = vmatprep.subr.mxu0 0.0
    %605 = vmatpush1.msra.mxu0 %v372
    %606 = vmatprep.subr.mxu0 0.0
    %607 = vmatpush1.msra.mxu0 %v371
    %608 = vmatprep.subr.mxu0 0.0
    %609 = vmatpush1.msra.mxu0 %v370
    %610 = vmatprep.subr.mxu0 0.0
    %611 = vmatpush1.msra.mxu0 %v369
    %612 = vmatprep.subr.mxu0 0.0
    %613 = vmatpush2.msra.mxu0 %v400
    %614 = vmatprep.subr.mxu0 0.0
    %615 = vmatpush2.msra.mxu0 %v399
    %616 = vmatprep.subr.mxu0 0.0
    %617 = vmatpush2.msra.mxu0 %v398
    %618 = vmatprep.subr.mxu0 0.0
    %619 = vmatpush2.msra.mxu0 %v397
    %620 = vmatprep.subr.mxu0 0.0
    %621 = vmatpush2.msra.mxu0 %v396
    %622 = vmatprep.subr.mxu0 0.0
    %623 = vmatpush2.msra.mxu0 %v395
    %624 = vmatprep.subr.mxu0 0.0
    %625 = vmatpush2.msra.mxu0 %v394
    %626 = vmatprep.subr.mxu0 0.0
    %627 = vmatpush2.msra.mxu0 %v393
    %628 = vmatprep.subr.mxu0 0.0
    %629 = vmatpush2.msra.mxu0 %v392
    %630 = vmatprep.subr.mxu0 0.0
    %631 = vmatpush2.msra.mxu0 %v391
    %632 = vmatprep.subr.mxu0 0.0
    %633 = vmatpush2.msra.mxu0 %v390
    %634 = vmatprep.subr.mxu0 0.0
    %635 = vmatpush2.msra.mxu0 %v389
    %636 = vmatprep.subr.mxu0 0.0
    %637 = vmatpush2.msra.mxu0 %v388
    %638 = vmatprep.subr.mxu0 0.0
    %639 = vmatpush2.msra.mxu0 %v387
    %640 = vmatprep.subr.mxu0 0.0
    %641 = vmatpush2.msra.mxu0 %v386
    %642 = vmatprep.subr.mxu0 0.0
    %643 = vmatpush2.msra.mxu0 %v385
    %644 = vmatprep.mubr.f32.mxu0 %v302
    %645 = vmatmul.mubr.f32.gmra.mxu0 %v301
    %v646 = vpop.f32.mrf.mxu0
    %v647 = vadd.f32 %v577, %v646
    %v648 = vpop.f32.mrf.mxu0
    %649 = vdwg.mxu0
    %650 = vmatprep.subr.mxu0 0.0
    %651 = vmatpush1.msra.mxu0 %v416
    %652 = vmatprep.subr.mxu0 0.0
    %653 = vmatpush1.msra.mxu0 %v415
    %654 = vmatprep.subr.mxu0 0.0
    %655 = vmatpush1.msra.mxu0 %v414
    %656 = vmatprep.subr.mxu0 0.0
    %657 = vmatpush1.msra.mxu0 %v413
    %658 = vmatprep.subr.mxu0 0.0
    %659 = vmatpush1.msra.mxu0 %v412
    %660 = vmatprep.subr.mxu0 0.0
    %661 = vmatpush1.msra.mxu0 %v411
    %662 = vmatprep.subr.mxu0 0.0
    %663 = vmatpush1.msra.mxu0 %v410
    %664 = vmatprep.subr.mxu0 0.0
    %665 = vmatpush1.msra.mxu0 %v409
    %666 = vmatprep.subr.mxu0 0.0
    %667 = vmatpush1.msra.mxu0 %v408
    %668 = vmatprep.subr.mxu0 0.0
    %669 = vmatpush1.msra.mxu0 %v407
    %670 = vmatprep.subr.mxu0 0.0
    %671 = vmatpush1.msra.mxu0 %v406
    %672 = vmatprep.subr.mxu0 0.0
    %673 = vmatpush1.msra.mxu0 %v405
    %674 = vmatprep.subr.mxu0 0.0
    %675 = vmatpush1.msra.mxu0 %v404
    %676 = vmatprep.subr.mxu0 0.0
    %677 = vmatpush1.msra.mxu0 %v403
    %678 = vmatprep.subr.mxu0 0.0
    %679 = vmatpush1.msra.mxu0 %v402
    %680 = vmatprep.subr.mxu0 0.0
    %681 = vmatpush1.msra.mxu0 %v401
    %682 = vmatprep.subr.mxu0 0.0
    %683 = vmatpush2.msra.mxu0 %v432
    %684 = vmatprep.subr.mxu0 0.0
    %685 = vmatpush2.msra.mxu0 %v431
    %686 = vmatprep.subr.mxu0 0.0
    %687 = vmatpush2.msra.mxu0 %v430
    %688 = vmatprep.subr.mxu0 0.0
    %689 = vmatpush2.msra.mxu0 %v429
    %690 = vmatprep.subr.mxu0 0.0
    %691 = vmatpush2.msra.mxu0 %v428
    %692 = vmatprep.subr.mxu0 0.0
    %693 = vmatpush2.msra.mxu0 %v427
    %694 = vmatprep.subr.mxu0 0.0
    %695 = vmatpush2.msra.mxu0 %v426
    %696 = vmatprep.subr.mxu0 0.0
    %697 = vmatpush2.msra.mxu0 %v425
    %698 = vmatprep.subr.mxu0 0.0
    %699 = vmatpush2.msra.mxu0 %v424
    %700 = vmatprep.subr.mxu0 0.0
    %701 = vmatpush2.msra.mxu0 %v423
    %702 = vmatprep.subr.mxu0 0.0
    %703 = vmatpush2.msra.mxu0 %v422
    %704 = vmatprep.subr.mxu0 0.0
    %705 = vmatpush2.msra.mxu0 %v421
    %706 = vmatprep.subr.mxu0 0.0
    %707 = vmatpush2.msra.mxu0 %v420
    %708 = vmatprep.subr.mxu0 0.0
    %709 = vmatpush2.msra.mxu0 %v419
    %710 = vmatprep.subr.mxu0 0.0
    %711 = vmatpush2.msra.mxu0 %v418
    %712 = vmatprep.subr.mxu0 0.0
    %713 = vmatpush2.msra.mxu0 %v417
    %714 = vmatprep.mubr.f32.mxu0 %v304
    %715 = vmatmul.mubr.f32.gmra.mxu0 %v303
    %v716 = vpop.f32.mrf.mxu0
    %v717 = vadd.f32 %v647, %v716
    %v718 = vpop.f32.mrf.mxu0
    %719 = vdwg.mxu0
    %720 = vst [vmem:[#allocation14] sm:$0x3] %v717
    %721 = vst [vmem:[#allocation15 - $0x2] sm:$0xc] %v717
    // Predicated region
    $region46: #{tpu_custom_call.1} parent=1 // pred_check
      _
    $region47: #{tpu_custom_call.1} parent=1 // pred_check_branch
      %723 = sbr.rel (0) target = $region49
    $region48: #{tpu_custom_call.1} parent=1 // pred_region
      %s725 = ssub.s32 256, 256
      %726 = vsyncadd [#allocation4], %s725
      %s728 = sshll.u32 [#allocation11], 4
      %s729 = int_to_ptr.vmem [resolvable:$true] %s728
      %731 = dma.vmem_to_hbm [thread:$0]  %s729, 256, %s6, [#allocation4]
    $region49: #{tpu_custom_call.1} parent=1 // pred_fallthru
      _
    // Predicated region
    $region50: #{tpu_custom_call.1} parent=1 // pred_check
      _
    $region51: #{tpu_custom_call.1} parent=1 // pred_check_branch
      %733 = sbr.rel (0) target = $region53
    $region52: #{tpu_custom_call.1} parent=1 // pred_region
      %s735 = ssub.s32 256, 256
      %736 = vsyncadd [#allocation13], %s735
      %s738 = sshll.u32 [#allocation12], 4
      %s739 = int_to_ptr.vmem [resolvable:$true] %s738
      %741 = dma.vmem_to_hbm [thread:$0]  %s739, 256, %s7, [#allocation13]
    $region53: #{tpu_custom_call.1} parent=1 // pred_fallthru
      _
    // Predicated region
    $region54: #{tpu_custom_call.1} parent=1 // pred_check
      _
    $region55: #{tpu_custom_call.1} parent=1 // pred_check_branch
      %743 = sbr.rel (0) target = $region57
    $region56: #{tpu_custom_call.1} parent=1 // pred_region
      %s745 = ssub.s32 32, 32
      %746 = vsyncadd [#allocation13], %s745
      %s748 = sshll.u32 [#allocation14], 4
      %s749 = int_to_ptr.vmem [resolvable:$true] %s748
      %751 = dma.vmem_to_hbm [thread:$0]  %s749, 32, %s8, [#allocation13]
    $region57: #{tpu_custom_call.1} parent=1 // pred_fallthru
      _
    // Predicated region
    $region58: #{tpu_custom_call.1} parent=1 // pred_check
      _
    $region59: #{tpu_custom_call.1} parent=1 // pred_check_branch
      %753 = sbr.rel (0) target = $region61
    $region60: #{tpu_custom_call.1} parent=1 // pred_region
      %s755 = ssub.s32 32, 32
      %756 = vsyncadd [#allocation16], %s755
      %s758 = sshll.u32 [#allocation15], 4
      %s759 = int_to_ptr.vmem [resolvable:$true] %s758
      %761 = dma.vmem_to_hbm [thread:$0]  %s759, 32, %s9, [#allocation16]
    $region61: #{tpu_custom_call.1} parent=1 // pred_fallthru
      _
    // Predicated region
    $region62: #{tpu_custom_call.1} parent=1 // pred_check
      _
    $region63: #{tpu_custom_call.1} parent=1 // pred_check_branch
      %763 = sbr.rel (0) target = $region65
    $region64: #{tpu_custom_call.1} parent=1 // pred_region
      %764 = dma.done [#allocation4], 256
    $region65: #{tpu_custom_call.1} parent=1 // pred_fallthru
      _
    // Predicated region
    $region66: #{tpu_custom_call.1} parent=1 // pred_check
      _
    $region67: #{tpu_custom_call.1} parent=1 // pred_check_branch
      %766 = sbr.rel (0) target = $region69
    $region68: #{tpu_custom_call.1} parent=1 // pred_region
      %767 = dma.done [#allocation13], 256
    $region69: #{tpu_custom_call.1} parent=1 // pred_fallthru
      _
    // Predicated region
    $region70: #{tpu_custom_call.1} parent=1 // pred_check
      _
    $region71: #{tpu_custom_call.1} parent=1 // pred_check_branch
      %769 = sbr.rel (0) target = $region73
    $region72: #{tpu_custom_call.1} parent=1 // pred_region
      %770 = dma.done [#allocation13], 32
    $region73: #{tpu_custom_call.1} parent=1 // pred_fallthru
      _
    // Predicated region
    $region74: #{tpu_custom_call.1} parent=1 // pred_check
      _
    $region75: #{tpu_custom_call.1} parent=1 // pred_check_branch
      %772 = sbr.rel (0) target = $region77
    $region76: #{tpu_custom_call.1} parent=1 // pred_region
      %773 = dma.done [#allocation16], 32
    $region77: #{tpu_custom_call.1} parent=1 // pred_fallthru
      _
    %774 = vsyncpa [#allocation3], 1
    %775 = vsyncpa [#allocation6], 1
    %776 = vsyncpa [#allocation9], 1
    %777 = vsyncpa [#allocation4], 1
    %778 = vsyncpa [#allocation13], 1
    %779 = vsyncpa [#allocation16], 1

</llo_original>
